<compile_context>
chip_gen: v7x
topology: tpu7x:2x2x1
jax: 0.10.0
libtpu: 0.0.40
codegen_flags: <defaults>
</compile_context>

<pallas_src>
import math

import jax
import jax.numpy as jnp
from jax.experimental import pallas as pl
from jax.experimental.pallas import tpu as pltpu


def _round_up(a: int, b: int) -> int:
    return (a + b - 1) // b * b


def _physical_vmem_bytes() -> int:
    """Per-core VMEM capacity, with a conservative fallback."""
    try:
        v = int(pltpu.get_tpu_info().vmem_capacity_bytes)
        if v > 0:
            return v
    except Exception:
        pass
    try:
        kind = jax.devices()[0].device_kind.lower()
    except Exception:
        kind = ""
    if any(t in kind for t in ("v4", "v5", "v6")):
        return 128 * 1024 * 1024
    return 64 * 1024 * 1024  # v7x and unknown generations: be conservative


def _divisor_tile(total: int, cap: int) -> int:
    """Largest multiple of 128 that divides `total` and is <= cap."""
    cap = max(128, min(cap, total))
    best = 128
    t = 128
    while t <= cap:
        if total % t == 0:
            best = t
        t += 128
    return best


def _ffn_kernel(x_ref, w1_ref, b1_ref, w2_ref, b2_ref, o_ref):
    # x_ref : (tile_m, dmp)  bf16
    # w1_ref: (dmp, tile_f)  bf16      b1_ref: (1, tile_f)  f32
    # w2_ref: (tile_f, dmp)  bf16      b2_ref: (1, dmp)     f32
    # o_ref : (tile_m, dmp)  f32 -- resident accumulator across the f axis
    f = pl.program_id(1)

    @pl.when(f == 0)
    def _():
        # Seed the resident output tile with the second bias (no finalize pass).
        o_ref[...] = jnp.broadcast_to(b2_ref[...], o_ref.shape)

    # First matmul: x @ W1[:, chunk]  (bf16 in, f32 acc); bias + ReLU in f32.
    h = jnp.dot(x_ref[...], w1_ref[...], preferred_element_type=jnp.float32)
    h = jnp.maximum(h + b1_ref[...], 0.0)
    # Dropout == identity (inference / eval mode).
    # TODO(synk): training-mode dropout via pltpu.prng_random_bits / (1 - p).

    # Second matmul: accumulate ReLU(...) @ W2[chunk, :] into the output tile.
    o_ref[...] += jnp.dot(h.astype(jnp.bfloat16), w2_ref[...],
                          preferred_element_type=jnp.float32)


def prepare_ffn_params(w1, b1, w2, b2):
    """Pad + cast FFN weights once (hoisted out of the per-call path).

    w1: [d_model, d_ff], b1: [d_ff], w2: [d_ff, d_model], b2: [d_model].
    Zero-padding is numerically exact (padded d_ff columns give ReLU(0)=0).
    """
    d_model, d_ff = w1.shape
    dmp = _round_up(d_model, 128)
    dfp = _round_up(d_ff, 128)

    def _pad(a, shape, dtype):
        a = jnp.asarray(a, dtype)
        if a.shape == shape:
            return a
        out = jnp.zeros(shape, dtype)
        return out.at[tuple(slice(0, s) for s in a.shape)].set(a)

    return dict(
        w1=_pad(w1, (dmp, dfp), jnp.bfloat16),
        b1=_pad(jnp.asarray(b1).reshape(1, d_ff), (1, dfp), jnp.float32),
        w2=_pad(w2, (dfp, dmp), jnp.bfloat16),
        b2=_pad(jnp.asarray(b2).reshape(1, d_model), (1, dmp), jnp.float32),
        d_model=d_model, d_ff=d_ff, dmp=dmp, dfp=dfp,
    )


def feed_forward(x, params, *, tile_m=None, tile_f_cap=1024):
    """x: [..., d_model] -> [..., d_model] using pre-prepared padded weights."""
    lead = x.shape[:-1]
    d_model = x.shape[-1]
    assert d_model == params["d_model"]
    dmp, dfp = params["dmp"], params["dfp"]
    M = int(math.prod(lead)) if lead else 1

    phys = _physical_vmem_bytes()
    budget = phys * 13 // 16  # ~52 MiB on v7x, ~104 MiB on v4/v5e/v6e

    # Row tiling: multiples of 16 (bf16 sublane packing), large enough to be
    # MXU-bound (weights are re-streamed once per row tile).
    m16 = _round_up(max(M, 1), 16)
    if tile_m is None:
        tile_m = 1024 if budget >= 90 * 1024 * 1024 else 512
    tile_m = min(_round_up(tile_m, 16), m16)
    # Keep >= 2 row tiles for large M so both v7x TensorCores get work.
    if m16 >= 512 and m16 // tile_m < 2:
        tile_m = _round_up((m16 + 1) // 2, 16)

    # d_ff chunk: a multiple of 128 that divides the (128-padded) d_ff.
    tile_f = _divisor_tile(dfp, tile_f_cap)

    def _est(tm, tf):
        return (2 * tm * dmp * 2      # x tile (double-buffered, bf16)
                + 2 * dmp * tf * 2    # W1 chunk
                + 2 * tf * dmp * 2    # W2 chunk
                + 2 * tm * dmp * 4    # f32 output tile (resident accumulator)
                + 2 * 8 * tf * 4      # b1 chunk (sublane padded)
                + 2 * 8 * dmp * 4)    # b2

    # Fit the working set into the per-generation VMEM budget:
    # shrink tile_f first (doesn't change per-row-tile weight traffic),
    # tile_m last (it sets arithmetic intensity).
    while _est(tile_m, tile_f) > budget:
        if tile_f > 256:
            tile_f = _divisor_tile(dfp, tile_f - 128)
        elif tile_m > 128:
            tile_m = max(128, _round_up(tile_m // 2, 16))
        elif tile_f > 128:
            tile_f = _divisor_tile(dfp, tile_f - 128)
        else:
            break

    tile_m = min(tile_m, m16)
    mp = _round_up(M, tile_m)
    grid = (mp // tile_m, dfp // tile_f)

    vmem_limit = int(min(budget,
                         max(_est(tile_m, tile_f) * 5 // 4, 32 * 1024 * 1024)))

    # Pad / cast x only when needed (skipped entirely for aligned shapes).
    xb = x.reshape(M, d_model).astype(jnp.bfloat16)
    if (mp, dmp) != (M, d_model):
        xb = jnp.zeros((mp, dmp), jnp.bfloat16).at[:M, :d_model].set(xb)

    out2d = pl.pallas_call(
        _ffn_kernel,
        out_shape=jax.ShapeDtypeStruct((mp, dmp), jnp.float32),
        grid_spec=pltpu.PrefetchScalarGridSpec(
            num_scalar_prefetch=0,
            grid=grid,
            in_specs=[
                pl.BlockSpec((tile_m, dmp), lambda i, f: (i, 0)),   # x tile
                pl.BlockSpec((dmp, tile_f), lambda i, f: (0, f)),   # W1 chunk
                pl.BlockSpec((1, tile_f), lambda i, f: (0, f)),     # b1 chunk
                pl.BlockSpec((tile_f, dmp), lambda i, f: (f, 0)),   # W2 chunk
                pl.BlockSpec((1, dmp), lambda i, f: (0, 0)),        # b2
            ],
            out_specs=pl.BlockSpec((tile_m, dmp), lambda i, f: (i, 0)),
        ),
        compiler_params=pltpu.CompilerParams(
            dimension_semantics=("parallel", "arbitrary"),
            vmem_limit_bytes=vmem_limit,
        ),
    )(xb, params["w1"], params["b1"], params["w2"], params["b2"])

    out = out2d
    if (mp, dmp) != (M, d_model):
        out = out2d[:M, :d_model]
    return out.reshape(*lead, d_model).astype(x.dtype)


if __name__ == "__main__":
    B, S, d_model, d_ff = 2, 8, 32, 512

    key = jax.random.PRNGKey(0)
    kx, k1, k2, k3, k4 = jax.random.split(key, 5)
    x = jax.random.normal(kx, (B, S, d_model), jnp.float32)

    # Deterministic init mimicking nn.Linear (uniform +/- 1/sqrt(fan_in)).
    bound1 = 1.0 / math.sqrt(d_model)
    bound2 = 1.0 / math.sqrt(d_ff)
    w1 = jax.random.uniform(k1, (d_model, d_ff), jnp.float32, -bound1, bound1)
    b1 = jax.random.uniform(k2, (d_ff,), jnp.float32, -bound1, bound1)
    w2 = jax.random.uniform(k3, (d_ff, d_model), jnp.float32, -bound2, bound2)
    b2 = jax.random.uniform(k4, (d_model,), jnp.float32, -bound2, bound2)

    params = prepare_ffn_params(w1, b1, w2, b2)   # pad / cast once
    out = feed_forward(x, params)
    out = jax.block_until_ready(out)

    # Reference check in plain JAX (f32); tolerance loosened for bf16 matmuls.
    ref = jnp.maximum(x.reshape(-1, d_model) @ w1 + b1, 0.0) @ w2 + b2
    ref = ref.reshape(B, S, d_model)
    assert out.shape == (B, S, d_model)
    err = float(jnp.max(jnp.abs(out - ref)))
    assert jnp.allclose(out, ref, atol=5e-2, rtol=5e-2), err

    print("KERNEL_OK")
</pallas_src>

<mosaic_0001>
module attributes {stable_mosaic.version = 11 : i64} {
  func.func @_ffn_kernel(%arg0: i32, %arg1: i32, %arg2: memref<16x128xbf16, #tpu.memory_space<vmem>>, %arg3: memref<128x512xbf16, #tpu.memory_space<vmem>>, %arg4: memref<1x512xf32, #tpu.memory_space<vmem>>, %arg5: memref<512x128xbf16, #tpu.memory_space<vmem>>, %arg6: memref<1x128xf32, #tpu.memory_space<vmem>>, %arg7: memref<16x128xf32, #tpu.memory_space<vmem>>) attributes {dimension_semantics = [#tpu.dimension_semantics<parallel>, #tpu.dimension_semantics<arbitrary>], iteration_bounds = array<i64: 1, 1>, scalar_prefetch = 0 : i64, scratch_operands = 0 : i64, tpu.core_type = #tpu.core_type<tc>, window_params = [{transform_indices = @transform_0, window_bounds = array<i64: 16, 128>}, {transform_indices = @transform_1, window_bounds = array<i64: 128, 512>}, {transform_indices = @transform_2, window_bounds = array<i64: 1, 512>}, {transform_indices = @transform_3, window_bounds = array<i64: 512, 128>}, {pipeline_mode = #tpu.pipeline_mode<synchronous>, transform_indices = @transform_4, window_bounds = array<i64: 1, 128>}, {transform_indices = @transform_5, window_bounds = array<i64: 16, 128>}]} {
    %c0_i32 = arith.constant 0 : i32
    %0 = arith.cmpi eq, %arg1, %c0_i32 : i32
    %1 = arith.extui %0 : i1 to i32
    %c0_i32_0 = arith.constant 0 : i32
    %2 = arith.cmpi ne, %1, %c0_i32_0 : i32
    scf.if %2 {
      %c0_14 = arith.constant 0 : index
      %c0_15 = arith.constant 0 : index
      %17 = vector.load %arg6[%c0_14, %c0_15] : memref<1x128xf32, #tpu.memory_space<vmem>>, vector<1x128xf32>
      %18 = vector.shape_cast %17 : vector<1x128xf32> to vector<1x128xf32>
      %19 = vector.broadcast %18 : vector<1x128xf32> to vector<16x128xf32>
      %c0_16 = arith.constant 0 : index
      %c0_17 = arith.constant 0 : index
      %20 = vector.load %arg7[%c0_16, %c0_17] : memref<16x128xf32, #tpu.memory_space<vmem>>, vector<16x128xf32>
      tpu.vector_store %arg7[%c0_16, %c0_17], %19 {strides = array<i32>} : memref<16x128xf32, #tpu.memory_space<vmem>>, vector<16x128xf32>,
    } else {
    }
    %c0 = arith.constant 0 : index
    %c0_1 = arith.constant 0 : index
    %3 = vector.load %arg2[%c0, %c0_1] : memref<16x128xbf16, #tpu.memory_space<vmem>>, vector<16x128xbf16>
    %c0_2 = arith.constant 0 : index
    %c0_3 = arith.constant 0 : index
    %4 = vector.load %arg3[%c0_2, %c0_3] : memref<128x512xbf16, #tpu.memory_space<vmem>>, vector<128x512xbf16>
    %cst = arith.constant dense<0.000000e+00> : vector<16x512xf32>
    %5 = tpu.matmul %3, %4, %cst {dimension_numbers = #tpu.dot_dimension_numbers<[1], [0], [0], [1], [0, 0, 1, 1], [], []>} : vector<16x128xbf16>, vector<128x512xbf16>, vector<16x512xf32> -> vector<16x512xf32>
    %c0_4 = arith.constant 0 : index
    %c0_5 = arith.constant 0 : index
    %6 = vector.load %arg4[%c0_4, %c0_5] : memref<1x512xf32, #tpu.memory_space<vmem>>, vector<1x512xf32>
    %7 = vector.broadcast %6 : vector<1x512xf32> to vector<16x512xf32>
    %8 = arith.addf %5, %7 : vector<16x512xf32>
    %cst_6 = arith.constant 0.000000e+00 : f32
    %9 = vector.broadcast %cst_6 : f32 to vector<16x512xf32>
    %10 = arith.maximumf %8, %9 : vector<16x512xf32>
    %c0_7 = arith.constant 0 : index
    %c0_8 = arith.constant 0 : index
    %11 = vector.load %arg7[%c0_7, %c0_8] : memref<16x128xf32, #tpu.memory_space<vmem>>, vector<16x128xf32>
    %12 = arith.truncf %10 : vector<16x512xf32> to vector<16x512xbf16>
    %c0_9 = arith.constant 0 : index
    %c0_10 = arith.constant 0 : index
    %13 = vector.load %arg5[%c0_9, %c0_10] : memref<512x128xbf16, #tpu.memory_space<vmem>>, vector<512x128xbf16>
    %cst_11 = arith.constant dense<0.000000e+00> : vector<16x128xf32>
    %14 = tpu.matmul %12, %13, %cst_11 {dimension_numbers = #tpu.dot_dimension_numbers<[1], [0], [0], [1], [0, 0, 1, 1], [], []>} : vector<16x512xbf16>, vector<512x128xbf16>, vector<16x128xf32> -> vector<16x128xf32>
    %15 = arith.addf %11, %14 : vector<16x128xf32>
    %c0_12 = arith.constant 0 : index
    %c0_13 = arith.constant 0 : index
    %16 = vector.load %arg7[%c0_12, %c0_13] : memref<16x128xf32, #tpu.memory_space<vmem>>, vector<16x128xf32>
    tpu.vector_store %arg7[%c0_12, %c0_13], %15 {strides = array<i32>} : memref<16x128xf32, #tpu.memory_space<vmem>>, vector<16x128xf32>,
    return
  }
  func.func @transform_0(%arg0: i32, %arg1: i32) -> (i32, i32) {
    %c0_i32 = arith.constant 0 : i32
    %c0_i32_0 = arith.constant 0 : i32
    return %arg0, %c0_i32 : i32, i32
  }
  func.func @transform_1(%arg0: i32, %arg1: i32) -> (i32, i32) {
    %c0_i32 = arith.constant 0 : i32
    %c0_i32_0 = arith.constant 0 : i32
    return %c0_i32, %arg1 : i32, i32
  }
  func.func @transform_2(%arg0: i32, %arg1: i32) -> (i32, i32) {
    %c0_i32 = arith.constant 0 : i32
    %c0_i32_0 = arith.constant 0 : i32
    return %c0_i32, %arg1 : i32, i32
  }
  func.func @transform_3(%arg0: i32, %arg1: i32) -> (i32, i32) {
    %c0_i32 = arith.constant 0 : i32
    %c0_i32_0 = arith.constant 0 : i32
    return %arg1, %c0_i32 : i32, i32
  }
  func.func @transform_4(%arg0: i32, %arg1: i32) -> (i32, i32) {
    %c0_i32 = arith.constant 0 : i32
    %c0_i32_0 = arith.constant 0 : i32
    %c0_i32_1 = arith.constant 0 : i32
    return %c0_i32, %c0_i32_0 : i32, i32
  }
  func.func @transform_5(%arg0: i32, %arg1: i32) -> (i32, i32) {
    %c0_i32 = arith.constant 0 : i32
    %c0_i32_0 = arith.constant 0 : i32
    return %arg0, %c0_i32 : i32, i32
  }
}

</mosaic_0001>

<llo_original>
// kernel: tpu_custom_call.1
$region0: #{tpu_custom_call.1}
  #allocation0 [shape = 'u32[]', space=smem, size = 0x4, offset = 0x4, fixed_abs, tag = 'smem constant byte address 0x4 - core index']
  #allocation1 [shape = 'u32[144,128]{1,0:T(1,128)}', space=vmem, size = 0x12000, scoped, tag = 'internal scratch']
  %s0 = inlined_call_operand.hbm [shape: bf16[16,128], index: 0, kind: input, shape index: {}]
  %s1 = inlined_call_operand.hbm [shape: bf16[128,512], index: 1, kind: input, shape index: {}]
  %s2 = inlined_call_operand.vmem [shape: f32[1,512], index: 2, kind: input, shape index: {}]
  %s3 = inlined_call_operand.hbm [shape: bf16[512,128], index: 3, kind: input, shape index: {}]
  %s4 = inlined_call_operand.vmem [shape: f32[1,128], index: 4, kind: input, shape index: {}]
  %s5 = inlined_call_operand.hbm [shape: f32[16,128], index: 5, kind: output, shape index: {}]
  %s6 = sld [smem:[#allocation0]]
  $region46: #{tpu_custom_call.1} parent=0
    _
  %s8 = ssub.s32 1, %s6
  %s9 = scalar_select 0, %s8, %s6
  $region1: #{tpu_custom_call.1} parent=0
    #allocation2 [shape = 'u8[4096]{0}', space=vmem, size = 0x1000, scoped, tag = 'input window, operand 0, single buffered']
    #allocation3 [shape = 's32[1]{0}', space=sflag, size = 0x4, scoped, tag = 'scoped memory for tpu_custom_call.1']
    #allocation4 [shape = 's32[1]{0}', space=sflag, size = 0x4, scoped, tag = 'scoped memory for tpu_custom_call.1']
    #allocation5 [shape = 'u8[131072]{0}', space=vmem, size = 0x20000, scoped, tag = 'input window, operand 1, single buffered']
    #allocation6 [shape = 's32[1]{0}', space=sflag, size = 0x4, scoped, tag = 'scoped memory for tpu_custom_call.1']
    #allocation7 [shape = 'u8[131072]{0}', space=vmem, size = 0x20000, scoped, tag = 'input window, operand 3, single buffered']
    #allocation8 [shape = 'u8[8192]{0}', space=vmem, size = 0x2000, scoped, tag = 'output window, operand 0, single buffered']
    %10 = vsyncpa [#allocation3], 0
    %11 = vsyncpa [#allocation6], 0
    %12 = vsyncpa [#allocation4], 0
    // Predicated region
    $region2: #{tpu_custom_call.1} parent=1 // pred_check
      _
    $region3: #{tpu_custom_call.1} parent=1 // pred_check_branch
      %14 = sbr.rel (0) target = $region5
    $region4: #{tpu_custom_call.1} parent=1 // pred_region
      %s16 = ssub.s32 128, 128
      %17 = vsyncadd [#allocation3], %s16
      %s18 = sshll.u32 [#allocation2], 4
      %s19 = int_to_ptr.vmem [resolvable:$true] %s18
      %24 = dma.hbm_to_vmem [thread:$0]  %s0, 128, %s19, [#allocation3], 64, 64, 4
    $region5: #{tpu_custom_call.1} parent=1 // pred_fallthru
      _
    // Predicated region
    $region6: #{tpu_custom_call.1} parent=1 // pred_check
      _
    $region7: #{tpu_custom_call.1} parent=1 // pred_check_branch
      %26 = sbr.rel (0) target = $region9
    $region8: #{tpu_custom_call.1} parent=1 // pred_region
      %s28 = ssub.s32 4096, 4096
      %29 = vsyncadd [#allocation6], %s28
      %s30 = sshll.u32 [#allocation5], 4
      %s31 = int_to_ptr.vmem [resolvable:$true] %s30
      %36 = dma.hbm_to_vmem [thread:$0]  %s1, 4096, %s31, [#allocation6], 256, 256, 16
    $region9: #{tpu_custom_call.1} parent=1 // pred_fallthru
      _
    // Predicated region
    $region10: #{tpu_custom_call.1} parent=1 // pred_check
      _
    $region11: #{tpu_custom_call.1} parent=1 // pred_check_branch
      %38 = sbr.rel (0) target = $region13
    $region12: #{tpu_custom_call.1} parent=1 // pred_region
      _
    $region13: #{tpu_custom_call.1} parent=1 // pred_fallthru
      _
    // Predicated region
    $region14: #{tpu_custom_call.1} parent=1 // pred_check
      _
    $region15: #{tpu_custom_call.1} parent=1 // pred_check_branch
      %40 = sbr.rel (0) target = $region17
    $region16: #{tpu_custom_call.1} parent=1 // pred_region
      %s42 = ssub.s32 4096, 4096
      %43 = vsyncadd [#allocation6], %s42
      %s44 = sshll.u32 [#allocation7], 4
      %s45 = int_to_ptr.vmem [resolvable:$true] %s44
      %50 = dma.hbm_to_vmem [thread:$0]  %s3, 4096, %s45, [#allocation6], 64, 64, 4
    $region17: #{tpu_custom_call.1} parent=1 // pred_fallthru
      _
    // Predicated region
    $region18: #{tpu_custom_call.1} parent=1 // pred_check
      _
    $region19: #{tpu_custom_call.1} parent=1 // pred_check_branch
      %52 = sbr.rel (0) target = $region21
    $region20: #{tpu_custom_call.1} parent=1 // pred_region
      _
    $region21: #{tpu_custom_call.1} parent=1 // pred_fallthru
      _
    // Predicated region
    $region22: #{tpu_custom_call.1} parent=1 // pred_check
      _
    $region23: #{tpu_custom_call.1} parent=1 // pred_check_branch
      %54 = sbr.rel (0) target = $region25
    $region24: #{tpu_custom_call.1} parent=1 // pred_region
      %55 = dma.done [#allocation3], 128
    $region25: #{tpu_custom_call.1} parent=1 // pred_fallthru
      _
    // Predicated region
    $region26: #{tpu_custom_call.1} parent=1 // pred_check
      _
    $region27: #{tpu_custom_call.1} parent=1 // pred_check_branch
      %57 = sbr.rel (0) target = $region29
    $region28: #{tpu_custom_call.1} parent=1 // pred_region
      %58 = dma.done [#allocation6], 4096
    $region29: #{tpu_custom_call.1} parent=1 // pred_fallthru
      _
    // Predicated region
    $region30: #{tpu_custom_call.1} parent=1 // pred_check
      _
    $region31: #{tpu_custom_call.1} parent=1 // pred_check_branch
      %60 = sbr.rel (0) target = $region33
    $region32: #{tpu_custom_call.1} parent=1 // pred_region
      %61 = dma.done [#allocation6], 4096
    $region33: #{tpu_custom_call.1} parent=1 // pred_fallthru
      _
    %p63 = scmp.eq.s32.totalorder 0, 0
    // Predicated region
    $region34: #{tpu_custom_call.1} parent=1 // pred_check
      %p64 = pneg %p63
    $region35: #{tpu_custom_call.1} parent=1 // pred_check_branch
      %66 = sbr.rel (%p64) target = $region37
    $region36: #{tpu_custom_call.1} parent=1 // pred_region
      %v67 = vld [vmem:[%s4] sm:$0x1]
      %v69 = vlaneseq
      %v70 = vshrl.u32 %v69, 7
      %v71 = vsub.s32 0, %v70
      %v72 = vrot.slane %v67, %v71
      %74 = vst [vmem:[#allocation8] sm:$0xff] %v72
      %75 = vst [vmem:[#allocation8 + $0x8] sm:$0xff] %v72
    $region37: #{tpu_custom_call.1} parent=1 // pred_fallthru
      _
    %v76 = vld [vmem:[#allocation2] sm:$0xf]
    %v77 = vld [vmem:[#allocation2 + $0x4] sm:$0xf]
    %v78 = vld [vmem:[#allocation5] sm:$0xff]
    %v79 = vld [vmem:[#allocation5 + $0x8] sm:$0xff]
    %v80 = vld [vmem:[#allocation5 + $0x10] sm:$0xff]
    %v81 = vld [vmem:[#allocation5 + $0x18] sm:$0xff]
    %v82 = vld [vmem:[#allocation5 + $0x20] sm:$0xff]
    %v83 = vld [vmem:[#allocation5 + $0x28] sm:$0xff]
    %v84 = vld [vmem:[#allocation5 + $0x30] sm:$0xff]
    %v85 = vld [vmem:[#allocation5 + $0x38] sm:$0xff]
    %v86 = vld [vmem:[#allocation5 + $0x40] sm:$0xff]
    %v87 = vld [vmem:[#allocation5 + $0x48] sm:$0xff]
    %v88 = vld [vmem:[#allocation5 + $0x50] sm:$0xff]
    %v89 = vld [vmem:[#allocation5 + $0x58] sm:$0xff]
    %v90 = vld [vmem:[#allocation5 + $0x60] sm:$0xff]
    %v91 = vld [vmem:[#allocation5 + $0x68] sm:$0xff]
    %v92 = vld [vmem:[#allocation5 + $0x70] sm:$0xff]
    %v93 = vld [vmem:[#allocation5 + $0x78] sm:$0xff]
    %v94 = vld [vmem:[#allocation5 + $0x80] sm:$0xff]
    %v95 = vld [vmem:[#allocation5 + $0x88] sm:$0xff]
    %v96 = vld [vmem:[#allocation5 + $0x90] sm:$0xff]
    %v97 = vld [vmem:[#allocation5 + $0x98] sm:$0xff]
    %v98 = vld [vmem:[#allocation5 + $0xa0] sm:$0xff]
    %v99 = vld [vmem:[#allocation5 + $0xa8] sm:$0xff]
    %v100 = vld [vmem:[#allocation5 + $0xb0] sm:$0xff]
    %v101 = vld [vmem:[#allocation5 + $0xb8] sm:$0xff]
    %v102 = vld [vmem:[#allocation5 + $0xc0] sm:$0xff]
    %v103 = vld [vmem:[#allocation5 + $0xc8] sm:$0xff]
    %v104 = vld [vmem:[#allocation5 + $0xd0] sm:$0xff]
    %v105 = vld [vmem:[#allocation5 + $0xd8] sm:$0xff]
    %v106 = vld [vmem:[#allocation5 + $0xe0] sm:$0xff]
    %v107 = vld [vmem:[#allocation5 + $0xe8] sm:$0xff]
    %v108 = vld [vmem:[#allocation5 + $0xf0] sm:$0xff]
    %v109 = vld [vmem:[#allocation5 + $0xf8] sm:$0xff]
    %v110 = vld [vmem:[%s2] sm:$0xf]
    %v112 = vlaneseq
    %v113 = vshrl.u32 %v112, 7
    %v114 = vsub.s32 0, %v113
    %v115 = vrot.slane %v110, %v114
    %v116 = vlaneseq
    %v117 = vshrl.u32 %v116, 7
    %v118 = vsub.s32 1, %v117
    %v119 = vrot.slane %v110, %v118
    %v120 = vlaneseq
    %v121 = vshrl.u32 %v120, 7
    %v122 = vsub.s32 2, %v121
    %v123 = vrot.slane %v110, %v122
    %v124 = vlaneseq
    %v125 = vshrl.u32 %v124, 7
    %v126 = vsub.s32 3, %v125
    %v127 = vrot.slane %v110, %v126
    %v134 = vunpack.c.l.b16 %v76
    %v135 = vunpack.c.l.b16 %v77
    %v136 = vpack.c.b16 %v135, %v134
    %v170 = vunpack.c.l.b16 %v78
    %v171 = vunpack.c.h.b16 %v78
    %v172 = vunpack.c.l.b16 %v79
    %v173 = vunpack.c.h.b16 %v79
    %v174 = vunpack.c.l.b16 %v80
    %v175 = vunpack.c.h.b16 %v80
    %v176 = vunpack.c.l.b16 %v81
    %v177 = vunpack.c.h.b16 %v81
    %v178 = vunpack.c.l.b16 %v82
    %v179 = vunpack.c.h.b16 %v82
    %v180 = vunpack.c.l.b16 %v83
    %v181 = vunpack.c.h.b16 %v83
    %v182 = vunpack.c.l.b16 %v84
    %v183 = vunpack.c.h.b16 %v84
    %v184 = vunpack.c.l.b16 %v85
    %v185 = vunpack.c.h.b16 %v85
    %v186 = vunpack.c.l.b16 %v86
    %v187 = vunpack.c.h.b16 %v86
    %v188 = vunpack.c.l.b16 %v87
    %v189 = vunpack.c.h.b16 %v87
    %v190 = vunpack.c.l.b16 %v88
    %v191 = vunpack.c.h.b16 %v88
    %v192 = vunpack.c.l.b16 %v89
    %v193 = vunpack.c.h.b16 %v89
    %v194 = vunpack.c.l.b16 %v90
    %v195 = vunpack.c.h.b16 %v90
    %v196 = vunpack.c.l.b16 %v91
    %v197 = vunpack.c.h.b16 %v91
    %v198 = vunpack.c.l.b16 %v92
    %v199 = vunpack.c.h.b16 %v92
    %v200 = vunpack.c.l.b16 %v93
    %v201 = vunpack.c.h.b16 %v93
    %v202 = vunpack.c.l.b16 %v94
    %v203 = vunpack.c.h.b16 %v94
    %v204 = vunpack.c.l.b16 %v95
    %v205 = vunpack.c.h.b16 %v95
    %v206 = vunpack.c.l.b16 %v96
    %v207 = vunpack.c.h.b16 %v96
    %v208 = vunpack.c.l.b16 %v97
    %v209 = vunpack.c.h.b16 %v97
    %v210 = vunpack.c.l.b16 %v98
    %v211 = vunpack.c.h.b16 %v98
    %v212 = vunpack.c.l.b16 %v99
    %v213 = vunpack.c.h.b16 %v99
    %v214 = vunpack.c.l.b16 %v100
    %v215 = vunpack.c.h.b16 %v100
    %v216 = vunpack.c.l.b16 %v101
    %v217 = vunpack.c.h.b16 %v101
    %v218 = vunpack.c.l.b16 %v102
    %v219 = vunpack.c.h.b16 %v102
    %v220 = vunpack.c.l.b16 %v103
    %v221 = vunpack.c.h.b16 %v103
    %v222 = vunpack.c.l.b16 %v104
    %v223 = vunpack.c.h.b16 %v104
    %v224 = vunpack.c.l.b16 %v105
    %v225 = vunpack.c.h.b16 %v105
    %v226 = vunpack.c.l.b16 %v106
    %v227 = vunpack.c.h.b16 %v106
    %v228 = vunpack.c.l.b16 %v107
    %v229 = vunpack.c.h.b16 %v107
    %v230 = vunpack.c.l.b16 %v108
    %v231 = vunpack.c.h.b16 %v108
    %v232 = vunpack.c.l.b16 %v109
    %v233 = vunpack.c.h.b16 %v109
    %v234 = vpack.c.b16 %v174, %v170
    %v235 = vpack.c.b16 %v175, %v171
    %v236 = vpack.c.b16 %v176, %v172
    %v237 = vpack.c.b16 %v177, %v173
    %v238 = vpack.c.b16 %v182, %v178
    %v239 = vpack.c.b16 %v183, %v179
    %v240 = vpack.c.b16 %v184, %v180
    %v241 = vpack.c.b16 %v185, %v181
    %v242 = vpack.c.b16 %v190, %v186
    %v243 = vpack.c.b16 %v191, %v187
    %v244 = vpack.c.b16 %v192, %v188
    %v245 = vpack.c.b16 %v193, %v189
    %v246 = vpack.c.b16 %v198, %v194
    %v247 = vpack.c.b16 %v199, %v195
    %v248 = vpack.c.b16 %v200, %v196
    %v249 = vpack.c.b16 %v201, %v197
    %v250 = vpack.c.b16 %v206, %v202
    %v251 = vpack.c.b16 %v207, %v203
    %v252 = vpack.c.b16 %v208, %v204
    %v253 = vpack.c.b16 %v209, %v205
    %v254 = vpack.c.b16 %v214, %v210
    %v255 = vpack.c.b16 %v215, %v211
    %v256 = vpack.c.b16 %v216, %v212
    %v257 = vpack.c.b16 %v217, %v213
    %v258 = vpack.c.b16 %v222, %v218
    %v259 = vpack.c.b16 %v223, %v219
    %v260 = vpack.c.b16 %v224, %v220
    %v261 = vpack.c.b16 %v225, %v221
    %v262 = vpack.c.b16 %v230, %v226
    %v263 = vpack.c.b16 %v231, %v227
    %v264 = vpack.c.b16 %v232, %v228
    %v265 = vpack.c.b16 %v233, %v229
    %298 = vmatprep.subr.bf16.mxu0 %v235
    %299 = vmatpush1.bf16.msra.mxu0 %v234
    %300 = vmatprep.subr.bf16.mxu0 %v239
    %301 = vmatpush1.bf16.msra.mxu0 %v238
    %302 = vmatprep.subr.bf16.mxu0 %v243
    %303 = vmatpush1.bf16.msra.mxu0 %v242
    %304 = vmatprep.subr.bf16.mxu0 %v247
    %305 = vmatpush1.bf16.msra.mxu0 %v246
    %306 = vmatprep.subr.bf16.mxu0 %v251
    %307 = vmatpush1.bf16.msra.mxu0 %v250
    %308 = vmatprep.subr.bf16.mxu0 %v255
    %309 = vmatpush1.bf16.msra.mxu0 %v254
    %310 = vmatprep.subr.bf16.mxu0 %v259
    %311 = vmatpush1.bf16.msra.mxu0 %v258
    %312 = vmatprep.subr.bf16.mxu0 %v263
    %313 = vmatpush1.bf16.msra.mxu0 %v262
    %314 = vmatprep.subr.bf16.mxu0 0
    %315 = vmatpush1.bf16.msra.mxu0 0
    %316 = vmatprep.subr.bf16.mxu0 0
    %317 = vmatpush1.bf16.msra.mxu0 0
    %318 = vmatprep.subr.bf16.mxu0 0
    %319 = vmatpush1.bf16.msra.mxu0 0
    %320 = vmatprep.subr.bf16.mxu0 0
    %321 = vmatpush1.bf16.msra.mxu0 0
    %322 = vmatprep.subr.bf16.mxu0 0
    %323 = vmatpush1.bf16.msra.mxu0 0
    %324 = vmatprep.subr.bf16.mxu0 0
    %325 = vmatpush1.bf16.msra.mxu0 0
    %326 = vmatprep.subr.bf16.mxu0 0
    %327 = vmatpush1.bf16.msra.mxu0 0
    %328 = vmatprep.subr.bf16.mxu0 0
    %329 = vmatpush1.bf16.msra.mxu0 0
    %330 = vmatprep.mubr.bf16.mxu0 0
    %331 = vmatmul.mubr.bf16.gmra.mrb[0].mxu0 %v136
    %v332 = vpop.f32.mrb[0].mxu0
    %v333 = vadd.f32 %v115, %v332
    %v334 = vpop.f32.mrb[0].mxu0
    %v335 = vadd.f32 %v119, %v334
    %v336 = vpop.f32.mrb[0].mxu0
    %v337 = vadd.f32 %v115, %v336
    %v338 = vpop.f32.mrb[0].mxu0
    %v339 = vadd.f32 %v119, %v338
    %340 = vdwg.mxu0
    %341 = vmatprep.subr.bf16.mxu0 %v237
    %342 = vmatpush1.bf16.msra.mxu0 %v236
    %343 = vmatprep.subr.bf16.mxu0 %v241
    %344 = vmatpush1.bf16.msra.mxu0 %v240
    %345 = vmatprep.subr.bf16.mxu0 %v245
    %346 = vmatpush1.bf16.msra.mxu0 %v244
    %347 = vmatprep.subr.bf16.mxu0 %v249
    %348 = vmatpush1.bf16.msra.mxu0 %v248
    %349 = vmatprep.subr.bf16.mxu0 %v253
    %350 = vmatpush1.bf16.msra.mxu0 %v252
    %351 = vmatprep.subr.bf16.mxu0 %v257
    %352 = vmatpush1.bf16.msra.mxu0 %v256
    %353 = vmatprep.subr.bf16.mxu0 %v261
    %354 = vmatpush1.bf16.msra.mxu0 %v260
    %355 = vmatprep.subr.bf16.mxu0 %v265
    %356 = vmatpush1.bf16.msra.mxu0 %v264
    %357 = vmatprep.subr.bf16.mxu0 0
    %358 = vmatpush1.bf16.msra.mxu0 0
    %359 = vmatprep.subr.bf16.mxu0 0
    %360 = vmatpush1.bf16.msra.mxu0 0
    %361 = vmatprep.subr.bf16.mxu0 0
    %362 = vmatpush1.bf16.msra.mxu0 0
    %363 = vmatprep.subr.bf16.mxu0 0
    %364 = vmatpush1.bf16.msra.mxu0 0
    %365 = vmatprep.subr.bf16.mxu0 0
    %366 = vmatpush1.bf16.msra.mxu0 0
    %367 = vmatprep.subr.bf16.mxu0 0
    %368 = vmatpush1.bf16.msra.mxu0 0
    %369 = vmatprep.subr.bf16.mxu0 0
    %370 = vmatpush1.bf16.msra.mxu0 0
    %371 = vmatprep.subr.bf16.mxu0 0
    %372 = vmatpush1.bf16.msra.mxu0 0
    %373 = vmatprep.mubr.bf16.mxu0 0
    %374 = vmatmul.mubr.bf16.gmra.mrb[0].mxu0 %v136
    %v375 = vpop.f32.mrb[0].mxu0
    %v376 = vadd.f32 %v123, %v375
    %v377 = vpop.f32.mrb[0].mxu0
    %v378 = vadd.f32 %v127, %v377
    %v379 = vpop.f32.mrb[0].mxu0
    %v380 = vadd.f32 %v123, %v379
    %v381 = vpop.f32.mrb[0].mxu0
    %v382 = vadd.f32 %v127, %v381
    %383 = vdwg.mxu0
    %v384 = vmax.f32 %v333, 0.0
    %v385 = vmax.f32 %v335, 0.0
    %v386 = vmax.f32 %v376, 0.0
    %v387 = vmax.f32 %v378, 0.0
    %v388 = vmax.f32 %v337, 0.0
    %v389 = vmax.f32 %v339, 0.0
    %v390 = vmax.f32 %v380, 0.0
    %v391 = vmax.f32 %v382, 0.0
    %v392 = vld [vmem:[#allocation8] sm:$0xff]
    %v393 = vld [vmem:[#allocation8 + $0x8] sm:$0xff]
    %v394 = vpack.c.bf16 %v388, %v384
    %v395 = vpack.c.bf16 %v389, %v385
    %v396 = vpack.c.bf16 %v390, %v386
    %v397 = vpack.c.bf16 %v391, %v387
    %v398 = vld [vmem:[#allocation7] sm:$0xf]
    %v399 = vld [vmem:[#allocation7 + $0x4] sm:$0xf]
    %v400 = vld [vmem:[#allocation7 + $0x8] sm:$0xf]
    %v401 = vld [vmem:[#allocation7 + $0xc] sm:$0xf]
    %v402 = vld [vmem:[#allocation7 + $0x10] sm:$0xf]
    %v403 = vld [vmem:[#allocation7 + $0x14] sm:$0xf]
    %v404 = vld [vmem:[#allocation7 + $0x18] sm:$0xf]
    %v405 = vld [vmem:[#allocation7 + $0x1c] sm:$0xf]
    %v406 = vld [vmem:[#allocation7 + $0x20] sm:$0xf]
    %v407 = vld [vmem:[#allocation7 + $0x24] sm:$0xf]
    %v408 = vld [vmem:[#allocation7 + $0x28] sm:$0xf]
    %v409 = vld [vmem:[#allocation7 + $0x2c] sm:$0xf]
    %v410 = vld [vmem:[#allocation7 + $0x30] sm:$0xf]
    %v411 = vld [vmem:[#allocation7 + $0x34] sm:$0xf]
    %v412 = vld [vmem:[#allocation7 + $0x38] sm:$0xf]
    %v413 = vld [vmem:[#allocation7 + $0x3c] sm:$0xf]
    %v414 = vld [vmem:[#allocation7 + $0x40] sm:$0xf]
    %v415 = vld [vmem:[#allocation7 + $0x44] sm:$0xf]
    %v416 = vld [vmem:[#allocation7 + $0x48] sm:$0xf]
    %v417 = vld [vmem:[#allocation7 + $0x4c] sm:$0xf]
    %v418 = vld [vmem:[#allocation7 + $0x50] sm:$0xf]
    %v419 = vld [vmem:[#allocation7 + $0x54] sm:$0xf]
    %v420 = vld [vmem:[#allocation7 + $0x58] sm:$0xf]
    %v421 = vld [vmem:[#allocation7 + $0x5c] sm:$0xf]
    %v422 = vld [vmem:[#allocation7 + $0x60] sm:$0xf]
    %v423 = vld [vmem:[#allocation7 + $0x64] sm:$0xf]
    %v424 = vld [vmem:[#allocation7 + $0x68] sm:$0xf]
    %v425 = vld [vmem:[#allocation7 + $0x6c] sm:$0xf]
    %v426 = vld [vmem:[#allocation7 + $0x70] sm:$0xf]
    %v427 = vld [vmem:[#allocation7 + $0x74] sm:$0xf]
    %v428 = vld [vmem:[#allocation7 + $0x78] sm:$0xf]
    %v429 = vld [vmem:[#allocation7 + $0x7c] sm:$0xf]
    %v430 = vld [vmem:[#allocation7 + $0x80] sm:$0xf]
    %v431 = vld [vmem:[#allocation7 + $0x84] sm:$0xf]
    %v432 = vld [vmem:[#allocation7 + $0x88] sm:$0xf]
    %v433 = vld [vmem:[#allocation7 + $0x8c] sm:$0xf]
    %v434 = vld [vmem:[#allocation7 + $0x90] sm:$0xf]
    %v435 = vld [vmem:[#allocation7 + $0x94] sm:$0xf]
    %v436 = vld [vmem:[#allocation7 + $0x98] sm:$0xf]
    %v437 = vld [vmem:[#allocation7 + $0x9c] sm:$0xf]
    %v438 = vld [vmem:[#allocation7 + $0xa0] sm:$0xf]
    %v439 = vld [vmem:[#allocation7 + $0xa4] sm:$0xf]
    %v440 = vld [vmem:[#allocation7 + $0xa8] sm:$0xf]
    %v441 = vld [vmem:[#allocation7 + $0xac] sm:$0xf]
    %v442 = vld [vmem:[#allocation7 + $0xb0] sm:$0xf]
    %v443 = vld [vmem:[#allocation7 + $0xb4] sm:$0xf]
    %v444 = vld [vmem:[#allocation7 + $0xb8] sm:$0xf]
    %v445 = vld [vmem:[#allocation7 + $0xbc] sm:$0xf]
    %v446 = vld [vmem:[#allocation7 + $0xc0] sm:$0xf]
    %v447 = vld [vmem:[#allocation7 + $0xc4] sm:$0xf]
    %v448 = vld [vmem:[#allocation7 + $0xc8] sm:$0xf]
    %v449 = vld [vmem:[#allocation7 + $0xcc] sm:$0xf]
    %v450 = vld [vmem:[#allocation7 + $0xd0] sm:$0xf]
    %v451 = vld [vmem:[#allocation7 + $0xd4] sm:$0xf]
    %v452 = vld [vmem:[#allocation7 + $0xd8] sm:$0xf]
    %v453 = vld [vmem:[#allocation7 + $0xdc] sm:$0xf]
    %v454 = vld [vmem:[#allocation7 + $0xe0] sm:$0xf]
    %v455 = vld [vmem:[#allocation7 + $0xe4] sm:$0xf]
    %v456 = vld [vmem:[#allocation7 + $0xe8] sm:$0xf]
    %v457 = vld [vmem:[#allocation7 + $0xec] sm:$0xf]
    %v458 = vld [vmem:[#allocation7 + $0xf0] sm:$0xf]
    %v459 = vld [vmem:[#allocation7 + $0xf4] sm:$0xf]
    %v460 = vld [vmem:[#allocation7 + $0xf8] sm:$0xf]
    %v461 = vld [vmem:[#allocation7 + $0xfc] sm:$0xf]
    %v526 = vunpack.c.l.b16 %v398
    %v527 = vunpack.c.l.b16 %v399
    %v528 = vunpack.c.l.b16 %v400
    %v529 = vunpack.c.l.b16 %v401
    %v530 = vunpack.c.l.b16 %v402
    %v531 = vunpack.c.l.b16 %v403
    %v532 = vunpack.c.l.b16 %v404
    %v533 = vunpack.c.l.b16 %v405
    %v534 = vunpack.c.l.b16 %v406
    %v535 = vunpack.c.l.b16 %v407
    %v536 = vunpack.c.l.b16 %v408
    %v537 = vunpack.c.l.b16 %v409
    %v538 = vunpack.c.l.b16 %v410
    %v539 = vunpack.c.l.b16 %v411
    %v540 = vunpack.c.l.b16 %v412
    %v541 = vunpack.c.l.b16 %v413
    %v542 = vunpack.c.l.b16 %v414
    %v543 = vunpack.c.l.b16 %v415
    %v544 = vunpack.c.l.b16 %v416
    %v545 = vunpack.c.l.b16 %v417
    %v546 = vunpack.c.l.b16 %v418
    %v547 = vunpack.c.l.b16 %v419
    %v548 = vunpack.c.l.b16 %v420
    %v549 = vunpack.c.l.b16 %v421
    %v550 = vunpack.c.l.b16 %v422
    %v551 = vunpack.c.l.b16 %v423
    %v552 = vunpack.c.l.b16 %v424
    %v553 = vunpack.c.l.b16 %v425
    %v554 = vunpack.c.l.b16 %v426
    %v555 = vunpack.c.l.b16 %v427
    %v556 = vunpack.c.l.b16 %v428
    %v557 = vunpack.c.l.b16 %v429
    %v558 = vunpack.c.l.b16 %v430
    %v559 = vunpack.c.l.b16 %v431
    %v560 = vunpack.c.l.b16 %v432
    %v561 = vunpack.c.l.b16 %v433
    %v562 = vunpack.c.l.b16 %v434
    %v563 = vunpack.c.l.b16 %v435
    %v564 = vunpack.c.l.b16 %v436
    %v565 = vunpack.c.l.b16 %v437
    %v566 = vunpack.c.l.b16 %v438
    %v567 = vunpack.c.l.b16 %v439
    %v568 = vunpack.c.l.b16 %v440
    %v569 = vunpack.c.l.b16 %v441
    %v570 = vunpack.c.l.b16 %v442
    %v571 = vunpack.c.l.b16 %v443
    %v572 = vunpack.c.l.b16 %v444
    %v573 = vunpack.c.l.b16 %v445
    %v574 = vunpack.c.l.b16 %v446
    %v575 = vunpack.c.l.b16 %v447
    %v576 = vunpack.c.l.b16 %v448
    %v577 = vunpack.c.l.b16 %v449
    %v578 = vunpack.c.l.b16 %v450
    %v579 = vunpack.c.l.b16 %v451
    %v580 = vunpack.c.l.b16 %v452
    %v581 = vunpack.c.l.b16 %v453
    %v582 = vunpack.c.l.b16 %v454
    %v583 = vunpack.c.l.b16 %v455
    %v584 = vunpack.c.l.b16 %v456
    %v585 = vunpack.c.l.b16 %v457
    %v586 = vunpack.c.l.b16 %v458
    %v587 = vunpack.c.l.b16 %v459
    %v588 = vunpack.c.l.b16 %v460
    %v589 = vunpack.c.l.b16 %v461
    %v590 = vpack.c.b16 %v527, %v526
    %v591 = vpack.c.b16 %v529, %v528
    %v592 = vpack.c.b16 %v531, %v530
    %v593 = vpack.c.b16 %v533, %v532
    %v594 = vpack.c.b16 %v535, %v534
    %v595 = vpack.c.b16 %v537, %v536
    %v596 = vpack.c.b16 %v539, %v538
    %v597 = vpack.c.b16 %v541, %v540
    %v598 = vpack.c.b16 %v543, %v542
    %v599 = vpack.c.b16 %v545, %v544
    %v600 = vpack.c.b16 %v547, %v546
    %v601 = vpack.c.b16 %v549, %v548
    %v602 = vpack.c.b16 %v551, %v550
    %v603 = vpack.c.b16 %v553, %v552
    %v604 = vpack.c.b16 %v555, %v554
    %v605 = vpack.c.b16 %v557, %v556
    %v606 = vpack.c.b16 %v559, %v558
    %v607 = vpack.c.b16 %v561, %v560
    %v608 = vpack.c.b16 %v563, %v562
    %v609 = vpack.c.b16 %v565, %v564
    %v610 = vpack.c.b16 %v567, %v566
    %v611 = vpack.c.b16 %v569, %v568
    %v612 = vpack.c.b16 %v571, %v570
    %v613 = vpack.c.b16 %v573, %v572
    %v614 = vpack.c.b16 %v575, %v574
    %v615 = vpack.c.b16 %v577, %v576
    %v616 = vpack.c.b16 %v579, %v578
    %v617 = vpack.c.b16 %v581, %v580
    %v618 = vpack.c.b16 %v583, %v582
    %v619 = vpack.c.b16 %v585, %v584
    %v620 = vpack.c.b16 %v587, %v586
    %v621 = vpack.c.b16 %v589, %v588
    %654 = vmatprep.subr.bf16.mxu0 0
    %655 = vmatpush1.bf16.msra.mxu0 %v590
    %656 = vmatprep.subr.bf16.mxu0 0
    %657 = vmatpush1.bf16.msra.mxu0 %v591
    %658 = vmatprep.subr.bf16.mxu0 0
    %659 = vmatpush1.bf16.msra.mxu0 %v592
    %660 = vmatprep.subr.bf16.mxu0 0
    %661 = vmatpush1.bf16.msra.mxu0 %v593
    %662 = vmatprep.subr.bf16.mxu0 0
    %663 = vmatpush1.bf16.msra.mxu0 %v594
    %664 = vmatprep.subr.bf16.mxu0 0
    %665 = vmatpush1.bf16.msra.mxu0 %v595
    %666 = vmatprep.subr.bf16.mxu0 0
    %667 = vmatpush1.bf16.msra.mxu0 %v596
    %668 = vmatprep.subr.bf16.mxu0 0
    %669 = vmatpush1.bf16.msra.mxu0 %v597
    %670 = vmatprep.subr.bf16.mxu0 0
    %671 = vmatpush1.bf16.msra.mxu0 %v598
    %672 = vmatprep.subr.bf16.mxu0 0
    %673 = vmatpush1.bf16.msra.mxu0 %v599
    %674 = vmatprep.subr.bf16.mxu0 0
    %675 = vmatpush1.bf16.msra.mxu0 %v600
    %676 = vmatprep.subr.bf16.mxu0 0
    %677 = vmatpush1.bf16.msra.mxu0 %v601
    %678 = vmatprep.subr.bf16.mxu0 0
    %679 = vmatpush1.bf16.msra.mxu0 %v602
    %680 = vmatprep.subr.bf16.mxu0 0
    %681 = vmatpush1.bf16.msra.mxu0 %v603
    %682 = vmatprep.subr.bf16.mxu0 0
    %683 = vmatpush1.bf16.msra.mxu0 %v604
    %684 = vmatprep.subr.bf16.mxu0 0
    %685 = vmatpush1.bf16.msra.mxu0 %v605
    %686 = vmatprep.mubr.bf16.mxu0 %v395
    %687 = vmatmul.mubr.bf16.gmra.mrb[0].mxu0 %v394
    %v688 = vpop.f32.mrb[0].mxu0
    %v689 = vadd.f32 0.0, %v688
    %v690 = vpop.f32.mrb[0].mxu0
    %v691 = vpop.f32.mrb[0].mxu0
    %v692 = vadd.f32 0.0, %v691
    %v693 = vpop.f32.mrb[0].mxu0
    %694 = vdwg.mxu0
    %695 = vmatprep.subr.bf16.mxu0 0
    %696 = vmatpush1.bf16.msra.mxu0 %v606
    %697 = vmatprep.subr.bf16.mxu0 0
    %698 = vmatpush1.bf16.msra.mxu0 %v607
    %699 = vmatprep.subr.bf16.mxu0 0
    %700 = vmatpush1.bf16.msra.mxu0 %v608
    %701 = vmatprep.subr.bf16.mxu0 0
    %702 = vmatpush1.bf16.msra.mxu0 %v609
    %703 = vmatprep.subr.bf16.mxu0 0
    %704 = vmatpush1.bf16.msra.mxu0 %v610
    %705 = vmatprep.subr.bf16.mxu0 0
    %706 = vmatpush1.bf16.msra.mxu0 %v611
    %707 = vmatprep.subr.bf16.mxu0 0
    %708 = vmatpush1.bf16.msra.mxu0 %v612
    %709 = vmatprep.subr.bf16.mxu0 0
    %710 = vmatpush1.bf16.msra.mxu0 %v613
    %711 = vmatprep.subr.bf16.mxu0 0
    %712 = vmatpush1.bf16.msra.mxu0 %v614
    %713 = vmatprep.subr.bf16.mxu0 0
    %714 = vmatpush1.bf16.msra.mxu0 %v615
    %715 = vmatprep.subr.bf16.mxu0 0
    %716 = vmatpush1.bf16.msra.mxu0 %v616
    %717 = vmatprep.subr.bf16.mxu0 0
    %718 = vmatpush1.bf16.msra.mxu0 %v617
    %719 = vmatprep.subr.bf16.mxu0 0
    %720 = vmatpush1.bf16.msra.mxu0 %v618
    %721 = vmatprep.subr.bf16.mxu0 0
    %722 = vmatpush1.bf16.msra.mxu0 %v619
    %723 = vmatprep.subr.bf16.mxu0 0
    %724 = vmatpush1.bf16.msra.mxu0 %v620
    %725 = vmatprep.subr.bf16.mxu0 0
    %726 = vmatpush1.bf16.msra.mxu0 %v621
    %727 = vmatprep.mubr.bf16.mxu0 %v397
    %728 = vmatmul.mubr.bf16.gmra.mrb[0].mxu0 %v396
    %v729 = vpop.f32.mrb[0].mxu0
    %v730 = vadd.f32 %v689, %v729
    %v731 = vpop.f32.mrb[0].mxu0
    %v732 = vpop.f32.mrb[0].mxu0
    %v733 = vadd.f32 %v692, %v732
    %v734 = vpop.f32.mrb[0].mxu0
    %735 = vdwg.mxu0
    %v736 = vadd.f32 %v392, %v730
    %v737 = vadd.f32 %v393, %v733
    %738 = vst [vmem:[#allocation8] sm:$0xff] %v736
    %739 = vst [vmem:[#allocation8 + $0x8] sm:$0xff] %v737
    // Predicated region
    $region38: #{tpu_custom_call.1} parent=1 // pred_check
      _
    $region39: #{tpu_custom_call.1} parent=1 // pred_check_branch
      %741 = sbr.rel (0) target = $region41
    $region40: #{tpu_custom_call.1} parent=1 // pred_region
      %s743 = ssub.s32 256, 256
      %744 = vsyncadd [#allocation4], %s743
      %s745 = sshll.u32 [#allocation8], 4
      %s746 = int_to_ptr.vmem [resolvable:$true] %s745
      %751 = dma.vmem_to_hbm [thread:$0]  %s746, 256, %s5, [#allocation4], 128, 128, 8
    $region41: #{tpu_custom_call.1} parent=1 // pred_fallthru
      _
    // Predicated region
    $region42: #{tpu_custom_call.1} parent=1 // pred_check
      _
    $region43: #{tpu_custom_call.1} parent=1 // pred_check_branch
      %753 = sbr.rel (0) target = $region45
    $region44: #{tpu_custom_call.1} parent=1 // pred_region
      %754 = dma.done [#allocation4], 256
    $region45: #{tpu_custom_call.1} parent=1 // pred_fallthru
      _
    %755 = vsyncpa [#allocation3], 1
    %756 = vsyncpa [#allocation6], 1
    %757 = vsyncpa [#allocation4], 1

</llo_original>
